<compile_context>
chip_gen: v5e
topology: v5e:2x2
jax: 0.10.0
libtpu: 0.0.40
codegen_flags: <defaults>
</compile_context>

<pallas_src>
import numpy as np
import jax
import jax.numpy as jnp
from jax import lax
from jax.experimental import pallas as pl
from jax.experimental.pallas import tpu as pltpu


# ---------------------------------------------------------------------------
# Pallas kernel
# ---------------------------------------------------------------------------
def _bilstm_kernel(xcat_ref, wih_ref, whh_ref, b_ref,
                   out_ref, hn_ref, cn_ref, gih_ref):
    T = xcat_ref.shape[0]
    H2 = whh_ref.shape[0]          # 2H  (fwd | bwd hidden, concatenated)
    H = H2 // 2

    # --- Hoisted input projection: one lane-dense (T, 2E) @ (2E, 8H) matmul.
    # Bias is folded in once here (not per step). Column blocks are
    # [i_f i_b f_f f_b o_f o_b g_f g_b]; the forward blocks read the x rows of
    # x_cat, the backward blocks read the time-reversed rows, so row t of the
    # scratch already holds exactly what loop step t needs for both directions.
    gih_ref[...] = (
        jnp.dot(xcat_ref[...], wih_ref[...], preferred_element_type=jnp.float32)
        + b_ref[...])

    whh = whh_ref[...]             # (2H, 8H) block-diagonal recurrent weights (hoisted)

    def body(t, carry):
        h_cat, c_cat = carry       # (1, 2H) each: [fwd | bwd]

        # One fused recurrent matmul for both directions + one VPU add.
        gates = gih_ref[pl.ds(t, 1), :] + jnp.dot(
            h_cat, whh, preferred_element_type=jnp.float32)          # (1, 8H)

        # Two EUP launches instead of eight: sigmoid over the contiguous
        # i/f/o slab (both directions), tanh over the contiguous g slab.
        sig = jax.nn.sigmoid(gates[:, 0:6 * H])
        g_cat = jnp.tanh(gates[:, 6 * H:8 * H])
        i_cat = sig[:, 0:2 * H]
        f_cat = sig[:, 2 * H:4 * H]
        o_cat = sig[:, 4 * H:6 * H]

        c_new = f_cat * c_cat + i_cat * g_cat          # (1, 2H) elementwise
        h_new = o_cat * jnp.tanh(c_new)                # (1, 2H)

        # Single (1, 2H) store per step. The backward half is in loop order
        # (row t holds the bwd hidden for time T-1-t); the wrapper un-reverses it.
        out_ref[pl.ds(t, 1), :] = h_new
        return h_new, c_new

    zeros = jnp.zeros((1, H2), jnp.float32)
    # T is static -> fully unroll so per-step MXU/EUP latency overlaps across steps.
    h_cat, c_cat = lax.fori_loop(0, T, body, (zeros, zeros), unroll=True)

    hn_ref[...] = h_cat            # [h_fwd_final | h_bwd_final]
    cn_ref[...] = c_cat


# ---------------------------------------------------------------------------
# Wrapper-side weight layout construction (done once at init)
# ---------------------------------------------------------------------------
def _reorder_ifog(w, H):
    # PyTorch gate column order [i f g o] -> [i f o g]
    return jnp.concatenate(
        [w[:, 0:H], w[:, H:2 * H], w[:, 3 * H:4 * H], w[:, 2 * H:3 * H]], axis=1)


def _interleave_dirs(wf, wb, H):
    # wf, wb: (R, 4H) with gate blocks [i f o g].
    # Output (R, 8H) with column blocks [i_f i_b f_f f_b o_f o_b g_f g_b].
    R = wf.shape[0]
    stacked = jnp.stack([wf.reshape(R, 4, H), wb.reshape(R, 4, H)], axis=2)
    return stacked.reshape(R, 8 * H)


def build_bilstm_params(wih_f, whh_f, b_f, wih_b, whh_b, b_b):
    E, H4 = wih_f.shape
    H = H4 // 4

    wf = _reorder_ifog(wih_f, H)
    wb = _reorder_ifog(wih_b, H)
    # Applied to x_cat = [x | x_reversed]: rows 0:E feed the forward column
    # blocks only, rows E:2E feed the backward column blocks only.
    w_ih_aug = jnp.concatenate(
        [_interleave_dirs(wf, jnp.zeros_like(wf), H),
         _interleave_dirs(jnp.zeros_like(wb), wb, H)], axis=0)        # (2E, 8H)

    hf = _reorder_ifog(whh_f, H)
    hb = _reorder_ifog(whh_b, H)
    # Block-diagonal recurrent weights for the fused carry h_cat = [h_f | h_b].
    w_hh_blk = jnp.concatenate(
        [_interleave_dirs(hf, jnp.zeros_like(hf), H),
         _interleave_dirs(jnp.zeros_like(hb), hb, H)], axis=0)        # (2H, 8H)

    b_aug = _interleave_dirs(_reorder_ifog(b_f, H), _reorder_ifog(b_b, H), H)  # (1, 8H)
    return w_ih_aug, w_hh_blk, b_aug


# ---------------------------------------------------------------------------
# pallas_call wrapper
# ---------------------------------------------------------------------------
@jax.jit
def bilstm_pallas(x, w_ih_aug, w_hh_blk, b_aug):
    T, _ = x.shape
    H2 = w_hh_blk.shape[0]
    H = H2 // 2

    # Glue: concat x with its time-reversal so the kernel's hoisted projection
    # directly produces loop-ordered input gates for both directions.
    x_cat = jnp.concatenate([x, x[::-1]], axis=1)                     # (T, 2E)

    vmem = pl.BlockSpec(memory_space=pltpu.MemorySpace.VMEM)
    raw, hn_flat, cn_flat = pl.pallas_call(
        _bilstm_kernel,
        out_shape=(
            jax.ShapeDtypeStruct((T, H2), jnp.float32),   # loop-ordered hidden states
            jax.ShapeDtypeStruct((1, H2), jnp.float32),   # [h_fwd_final | h_bwd_final]
            jax.ShapeDtypeStruct((1, H2), jnp.float32),   # [c_fwd_final | c_bwd_final]
        ),
        in_specs=[vmem, vmem, vmem, vmem],
        out_specs=(vmem, vmem, vmem),
        scratch_shapes=[pltpu.VMEM((T, 4 * H2), jnp.float32)],        # hoisted gates_ih
    )(x_cat, w_ih_aug, w_hh_blk, b_aug)

    # Wrapper-side layout plumbing: the backward half was written in loop order;
    # reverse it back to time order and concat with the forward half.
    out = jnp.concatenate([raw[:, :H], raw[::-1, H:]], axis=1)        # (T, 2H)
    h_n = hn_flat.reshape(2, H)
    c_n = cn_flat.reshape(2, H)
    return out, h_n, c_n


# ---------------------------------------------------------------------------
# Module-level wrapper (synthetic equivalent of NL2CodeEncoder)
# ---------------------------------------------------------------------------
class NL2CodeEncoderState:
    def __init__(self, state, memory, words):
        self.state = state
        self.memory = memory
        self.words = words

    def find_word_occurrences(self, word):
        return [i for i, w in enumerate(self.words) if w == word]


class NL2CodeEncoderPallas:
    """Synthetic JAX/Pallas equivalent of NL2CodeEncoder.forward."""

    def __init__(self, vocab_size=50, word_emb_size=32, recurrent_size=32, seed=0):
        assert recurrent_size % 2 == 0
        self.vocab_size = vocab_size
        self.word_emb_size = word_emb_size
        self.recurrent_size = recurrent_size
        H = recurrent_size // 2
        E = word_emb_size

        key = jax.random.PRNGKey(seed)
        ks = jax.random.split(key, 8)
        k = 1.0 / np.sqrt(H)

        # Embedding table [V, E]
        self.embedding = jax.random.normal(ks[0], (vocab_size, E), jnp.float32) * 0.1
        # Raw LSTM weights, PyTorch gate order (i, f, g, o), x @ W form.
        self.wih_f = jax.random.uniform(ks[1], (E, 4 * H), jnp.float32, -k, k)
        self.whh_f = jax.random.uniform(ks[2], (H, 4 * H), jnp.float32, -k, k)
        self.b_f = jax.random.uniform(ks[3], (1, 4 * H), jnp.float32, -k, k)
        self.wih_b = jax.random.uniform(ks[4], (E, 4 * H), jnp.float32, -k, k)
        self.whh_b = jax.random.uniform(ks[5], (H, 4 * H), jnp.float32, -k, k)
        self.b_b = jax.random.uniform(ks[6], (1, 4 * H), jnp.float32, -k, k)

        # Kernel-friendly fused/permuted layouts, built once.
        self.w_ih_aug, self.w_hh_blk, self.b_aug = build_bilstm_params(
            self.wih_f, self.whh_f, self.b_f, self.wih_b, self.whh_b, self.b_b)

    def word_indices(self, words):
        # Deterministic, process-stable vocab mapping (stand-in for preproc.vocab.indices).
        idx = [sum(bytearray(w.encode("utf-8"))) % self.vocab_size for w in words]
        return jnp.array(idx, dtype=jnp.int32)

    def forward(self, desc_words):
        desc_indices = self.word_indices(desc_words)                # [T]
        desc_emb = jnp.take(self.embedding, desc_indices, axis=0)   # [T, E]  (gather = glue)
        out, h_n, c_n = bilstm_pallas(
            desc_emb, self.w_ih_aug, self.w_hh_blk, self.b_aug)
        memory = out[None, :, :]                                    # [1, T, 2H]
        state = (h_n[:, None, :], c_n[:, None, :])                  # ([2,1,H], [2,1,H])
        return NL2CodeEncoderState(state=state, memory=memory, words=desc_words)


# ---------------- pure-JAX reference for verification ----------------
def _lstm_dir_ref(x, wih, whh, b, reverse=False):
    H = whh.shape[0]
    xs = x[::-1] if reverse else x

    def step(carry, x_t):
        h, c = carry
        gates = x_t @ wih + h @ whh + b[0]
        i = jax.nn.sigmoid(gates[0:H])
        f = jax.nn.sigmoid(gates[H:2 * H])
        g = jnp.tanh(gates[2 * H:3 * H])
        o = jax.nn.sigmoid(gates[3 * H:4 * H])
        c = f * c + i * g
        h = o * jnp.tanh(c)
        return (h, c), h

    (h_n, c_n), hs = lax.scan(step, (jnp.zeros((H,)), jnp.zeros((H,))), xs)
    if reverse:
        hs = hs[::-1]
    return hs, h_n, c_n


def _bilstm_ref(x, wih_f, whh_f, b_f, wih_b, whh_b, b_b):
    hs_f, hnf, cnf = _lstm_dir_ref(x, wih_f, whh_f, b_f, reverse=False)
    hs_b, hnb, cnb = _lstm_dir_ref(x, wih_b, whh_b, b_b, reverse=True)
    out = jnp.concatenate([hs_f, hs_b], axis=-1)
    h_n = jnp.stack([hnf, hnb], axis=0)
    c_n = jnp.stack([cnf, cnb], axis=0)
    return out, h_n, c_n


if __name__ == "__main__":
    T = 8          # sequence length (number of description words)
    enc = NL2CodeEncoderPallas(vocab_size=50, word_emb_size=32, recurrent_size=32, seed=0)

    desc_words = ["show", "me", "the", "names", "of", "all", "the", "students"]
    assert len(desc_words) == T

    result = enc.forward(desc_words)
    memory = jax.block_until_ready(result.memory)
    h_n, c_n = result.state
    h_n = jax.block_until_ready(h_n)
    c_n = jax.block_until_ready(c_n)

    # Verify against a pure-JAX reference of the same bidirectional LSTM
    # (built from the raw, un-permuted weights).
    desc_indices = enc.word_indices(desc_words)
    x = jnp.take(enc.embedding, desc_indices, axis=0)
    out_ref, hn_ref, cn_ref = _bilstm_ref(
        x, enc.wih_f, enc.whh_f, enc.b_f, enc.wih_b, enc.whh_b, enc.b_b)

    assert memory.shape == (1, T, enc.recurrent_size)
    assert h_n.shape == (2, 1, enc.recurrent_size // 2)
    assert c_n.shape == (2, 1, enc.recurrent_size // 2)
    np.testing.assert_allclose(np.asarray(memory[0]), np.asarray(out_ref), atol=1e-5, rtol=1e-5)
    np.testing.assert_allclose(np.asarray(h_n[:, 0]), np.asarray(hn_ref), atol=1e-5, rtol=1e-5)
    np.testing.assert_allclose(np.asarray(c_n[:, 0]), np.asarray(cn_ref), atol=1e-5, rtol=1e-5)

    print("KERNEL_OK")
</pallas_src>

<mosaic_0001>
module attributes {stable_mosaic.version = 11 : i64} {
  func.func @_bilstm_kernel(%arg0: memref<8x64xf32, #tpu.memory_space<vmem>>, %arg1: memref<64x128xf32, #tpu.memory_space<vmem>>, %arg2: memref<32x128xf32, #tpu.memory_space<vmem>>, %arg3: memref<1x128xf32, #tpu.memory_space<vmem>>, %arg4: memref<8x32xf32, #tpu.memory_space<vmem>>, %arg5: memref<1x32xf32, #tpu.memory_space<vmem>>, %arg6: memref<1x32xf32, #tpu.memory_space<vmem>>, %arg7: memref<8x128xf32, #tpu.memory_space<vmem>>) attributes {dimension_semantics = [], scalar_prefetch = 0 : i64, scratch_operands = 1 : i64, tpu.core_type = #tpu.core_type<tc>} {
    %c0 = arith.constant 0 : index
    %c0_0 = arith.constant 0 : index
    %0 = vector.load %arg0[%c0, %c0_0] : memref<8x64xf32, #tpu.memory_space<vmem>>, vector<8x64xf32>
    %c0_1 = arith.constant 0 : index
    %c0_2 = arith.constant 0 : index
    %1 = vector.load %arg1[%c0_1, %c0_2] : memref<64x128xf32, #tpu.memory_space<vmem>>, vector<64x128xf32>
    %cst = arith.constant dense<0.000000e+00> : vector<8x128xf32>
    %2 = tpu.matmul %0, %1, %cst {dimension_numbers = #tpu.dot_dimension_numbers<[1], [0], [0], [1], [0, 0, 1, 1], [], []>} : vector<8x64xf32>, vector<64x128xf32>, vector<8x128xf32> -> vector<8x128xf32>
    %c0_3 = arith.constant 0 : index
    %c0_4 = arith.constant 0 : index
    %3 = vector.load %arg3[%c0_3, %c0_4] : memref<1x128xf32, #tpu.memory_space<vmem>>, vector<1x128xf32>
    %4 = vector.broadcast %3 : vector<1x128xf32> to vector<8x128xf32>
    %5 = arith.addf %2, %4 : vector<8x128xf32>
    %c0_5 = arith.constant 0 : index
    %c0_6 = arith.constant 0 : index
    %6 = vector.load %arg7[%c0_5, %c0_6] : memref<8x128xf32, #tpu.memory_space<vmem>>, vector<8x128xf32>
    tpu.vector_store %arg7[%c0_5, %c0_6], %5 {strides = array<i32>} : memref<8x128xf32, #tpu.memory_space<vmem>>, vector<8x128xf32>,
    %c0_7 = arith.constant 0 : index
    %c0_8 = arith.constant 0 : index
    %7 = vector.load %arg2[%c0_7, %c0_8] : memref<32x128xf32, #tpu.memory_space<vmem>>, vector<32x128xf32>
    %cst_9 = arith.constant 0.000000e+00 : f32
    %8 = vector.broadcast %cst_9 : f32 to vector<1x32xf32>
    %c0_i32 = arith.constant 0 : i32
    %9 = arith.index_cast %c0_i32 : i32 to index
    %c0_10 = arith.constant 0 : index
    %10 = vector.load %arg7[%9, %c0_10] : memref<8x128xf32, #tpu.memory_space<vmem>>, vector<1x128xf32>
    %cst_11 = arith.constant dense<0.000000e+00> : vector<1x128xf32>
    %11 = tpu.matmul %8, %7, %cst_11 {dimension_numbers = #tpu.dot_dimension_numbers<[1], [0], [0], [1], [0, 0, 1, 1], [], []>} : vector<1x32xf32>, vector<32x128xf32>, vector<1x128xf32> -> vector<1x128xf32>
    %12 = arith.addf %10, %11 : vector<1x128xf32>
    %13 = vector.extract_strided_slice %12 {offsets = [0, 0], sizes = [1, 96], strides = [1, 1]} : vector<1x128xf32> to vector<1x96xf32>
    %14 = arith.negf %13 : vector<1x96xf32>
    %15 = math.exp %14 : vector<1x96xf32>
    %cst_12 = arith.constant 1.000000e+00 : f32
    %16 = vector.broadcast %cst_12 : f32 to vector<1x96xf32>
    %17 = arith.addf %16, %15 : vector<1x96xf32>
    %18 = arith.divf %16, %17 : vector<1x96xf32>
    %19 = vector.extract_strided_slice %12 {offsets = [0, 96], sizes = [1, 32], strides = [1, 1]} : vector<1x128xf32> to vector<1x32xf32>
    %20 = math.tanh %19 : vector<1x32xf32>
    %21 = vector.extract_strided_slice %18 {offsets = [0, 0], sizes = [1, 32], strides = [1, 1]} : vector<1x96xf32> to vector<1x32xf32>
    %22 = vector.extract_strided_slice %18 {offsets = [0, 32], sizes = [1, 32], strides = [1, 1]} : vector<1x96xf32> to vector<1x32xf32>
    %23 = vector.extract_strided_slice %18 {offsets = [0, 64], sizes = [1, 32], strides = [1, 1]} : vector<1x96xf32> to vector<1x32xf32>
    %24 = arith.mulf %22, %8 : vector<1x32xf32>
    %25 = arith.mulf %21, %20 : vector<1x32xf32>
    %26 = arith.addf %24, %25 : vector<1x32xf32>
    %27 = math.tanh %26 : vector<1x32xf32>
    %28 = arith.mulf %23, %27 : vector<1x32xf32>
    %29 = arith.index_cast %c0_i32 : i32 to index
    %c0_13 = arith.constant 0 : index
    %30 = vector.load %arg4[%29, %c0_13] : memref<8x32xf32, #tpu.memory_space<vmem>>, vector<1x32xf32>
    tpu.vector_store %arg4[%29, %c0_13], %28 {strides = array<i32>} : memref<8x32xf32, #tpu.memory_space<vmem>>, vector<1x32xf32>,
    %c1_i32 = arith.constant 1 : i32
    %31 = arith.index_cast %c1_i32 : i32 to index
    %c0_14 = arith.constant 0 : index
    %32 = vector.load %arg7[%31, %c0_14] : memref<8x128xf32, #tpu.memory_space<vmem>>, vector<1x128xf32>
    %cst_15 = arith.constant dense<0.000000e+00> : vector<1x128xf32>
    %33 = tpu.matmul %28, %7, %cst_15 {dimension_numbers = #tpu.dot_dimension_numbers<[1], [0], [0], [1], [0, 0, 1, 1], [], []>} : vector<1x32xf32>, vector<32x128xf32>, vector<1x128xf32> -> vector<1x128xf32>
    %34 = arith.addf %32, %33 : vector<1x128xf32>
    %35 = vector.extract_strided_slice %34 {offsets = [0, 0], sizes = [1, 96], strides = [1, 1]} : vector<1x128xf32> to vector<1x96xf32>
    %36 = arith.negf %35 : vector<1x96xf32>
    %37 = math.exp %36 : vector<1x96xf32>
    %cst_16 = arith.constant 1.000000e+00 : f32
    %38 = vector.broadcast %cst_16 : f32 to vector<1x96xf32>
    %39 = arith.addf %38, %37 : vector<1x96xf32>
    %40 = arith.divf %38, %39 : vector<1x96xf32>
    %41 = vector.extract_strided_slice %34 {offsets = [0, 96], sizes = [1, 32], strides = [1, 1]} : vector<1x128xf32> to vector<1x32xf32>
    %42 = math.tanh %41 : vector<1x32xf32>
    %43 = vector.extract_strided_slice %40 {offsets = [0, 0], sizes = [1, 32], strides = [1, 1]} : vector<1x96xf32> to vector<1x32xf32>
    %44 = vector.extract_strided_slice %40 {offsets = [0, 32], sizes = [1, 32], strides = [1, 1]} : vector<1x96xf32> to vector<1x32xf32>
    %45 = vector.extract_strided_slice %40 {offsets = [0, 64], sizes = [1, 32], strides = [1, 1]} : vector<1x96xf32> to vector<1x32xf32>
    %46 = arith.mulf %44, %26 : vector<1x32xf32>
    %47 = arith.mulf %43, %42 : vector<1x32xf32>
    %48 = arith.addf %46, %47 : vector<1x32xf32>
    %49 = math.tanh %48 : vector<1x32xf32>
    %50 = arith.mulf %45, %49 : vector<1x32xf32>
    %51 = arith.index_cast %c1_i32 : i32 to index
    %c0_17 = arith.constant 0 : index
    %52 = vector.load %arg4[%51, %c0_17] : memref<8x32xf32, #tpu.memory_space<vmem>>, vector<1x32xf32>
    tpu.vector_store %arg4[%51, %c0_17], %50 {strides = array<i32>} : memref<8x32xf32, #tpu.memory_space<vmem>>, vector<1x32xf32>,
    %c2_i32 = arith.constant 2 : i32
    %53 = arith.index_cast %c2_i32 : i32 to index
    %c0_18 = arith.constant 0 : index
    %54 = vector.load %arg7[%53, %c0_18] : memref<8x128xf32, #tpu.memory_space<vmem>>, vector<1x128xf32>
    %cst_19 = arith.constant dense<0.000000e+00> : vector<1x128xf32>
    %55 = tpu.matmul %50, %7, %cst_19 {dimension_numbers = #tpu.dot_dimension_numbers<[1], [0], [0], [1], [0, 0, 1, 1], [], []>} : vector<1x32xf32>, vector<32x128xf32>, vector<1x128xf32> -> vector<1x128xf32>
    %56 = arith.addf %54, %55 : vector<1x128xf32>
    %57 = vector.extract_strided_slice %56 {offsets = [0, 0], sizes = [1, 96], strides = [1, 1]} : vector<1x128xf32> to vector<1x96xf32>
    %58 = arith.negf %57 : vector<1x96xf32>
    %59 = math.exp %58 : vector<1x96xf32>
    %cst_20 = arith.constant 1.000000e+00 : f32
    %60 = vector.broadcast %cst_20 : f32 to vector<1x96xf32>
    %61 = arith.addf %60, %59 : vector<1x96xf32>
    %62 = arith.divf %60, %61 : vector<1x96xf32>
    %63 = vector.extract_strided_slice %56 {offsets = [0, 96], sizes = [1, 32], strides = [1, 1]} : vector<1x128xf32> to vector<1x32xf32>
    %64 = math.tanh %63 : vector<1x32xf32>
    %65 = vector.extract_strided_slice %62 {offsets = [0, 0], sizes = [1, 32], strides = [1, 1]} : vector<1x96xf32> to vector<1x32xf32>
    %66 = vector.extract_strided_slice %62 {offsets = [0, 32], sizes = [1, 32], strides = [1, 1]} : vector<1x96xf32> to vector<1x32xf32>
    %67 = vector.extract_strided_slice %62 {offsets = [0, 64], sizes = [1, 32], strides = [1, 1]} : vector<1x96xf32> to vector<1x32xf32>
    %68 = arith.mulf %66, %48 : vector<1x32xf32>
    %69 = arith.mulf %65, %64 : vector<1x32xf32>
    %70 = arith.addf %68, %69 : vector<1x32xf32>
    %71 = math.tanh %70 : vector<1x32xf32>
    %72 = arith.mulf %67, %71 : vector<1x32xf32>
    %73 = arith.index_cast %c2_i32 : i32 to index
    %c0_21 = arith.constant 0 : index
    %74 = vector.load %arg4[%73, %c0_21] : memref<8x32xf32, #tpu.memory_space<vmem>>, vector<1x32xf32>
    tpu.vector_store %arg4[%73, %c0_21], %72 {strides = array<i32>} : memref<8x32xf32, #tpu.memory_space<vmem>>, vector<1x32xf32>,
    %c3_i32 = arith.constant 3 : i32
    %75 = arith.index_cast %c3_i32 : i32 to index
    %c0_22 = arith.constant 0 : index
    %76 = vector.load %arg7[%75, %c0_22] : memref<8x128xf32, #tpu.memory_space<vmem>>, vector<1x128xf32>
    %cst_23 = arith.constant dense<0.000000e+00> : vector<1x128xf32>
    %77 = tpu.matmul %72, %7, %cst_23 {dimension_numbers = #tpu.dot_dimension_numbers<[1], [0], [0], [1], [0, 0, 1, 1], [], []>} : vector<1x32xf32>, vector<32x128xf32>, vector<1x128xf32> -> vector<1x128xf32>
    %78 = arith.addf %76, %77 : vector<1x128xf32>
    %79 = vector.extract_strided_slice %78 {offsets = [0, 0], sizes = [1, 96], strides = [1, 1]} : vector<1x128xf32> to vector<1x96xf32>
    %80 = arith.negf %79 : vector<1x96xf32>
    %81 = math.exp %80 : vector<1x96xf32>
    %cst_24 = arith.constant 1.000000e+00 : f32
    %82 = vector.broadcast %cst_24 : f32 to vector<1x96xf32>
    %83 = arith.addf %82, %81 : vector<1x96xf32>
    %84 = arith.divf %82, %83 : vector<1x96xf32>
    %85 = vector.extract_strided_slice %78 {offsets = [0, 96], sizes = [1, 32], strides = [1, 1]} : vector<1x128xf32> to vector<1x32xf32>
    %86 = math.tanh %85 : vector<1x32xf32>
    %87 = vector.extract_strided_slice %84 {offsets = [0, 0], sizes = [1, 32], strides = [1, 1]} : vector<1x96xf32> to vector<1x32xf32>
    %88 = vector.extract_strided_slice %84 {offsets = [0, 32], sizes = [1, 32], strides = [1, 1]} : vector<1x96xf32> to vector<1x32xf32>
    %89 = vector.extract_strided_slice %84 {offsets = [0, 64], sizes = [1, 32], strides = [1, 1]} : vector<1x96xf32> to vector<1x32xf32>
    %90 = arith.mulf %88, %70 : vector<1x32xf32>
    %91 = arith.mulf %87, %86 : vector<1x32xf32>
    %92 = arith.addf %90, %91 : vector<1x32xf32>
    %93 = math.tanh %92 : vector<1x32xf32>
    %94 = arith.mulf %89, %93 : vector<1x32xf32>
    %95 = arith.index_cast %c3_i32 : i32 to index
    %c0_25 = arith.constant 0 : index
    %96 = vector.load %arg4[%95, %c0_25] : memref<8x32xf32, #tpu.memory_space<vmem>>, vector<1x32xf32>
    tpu.vector_store %arg4[%95, %c0_25], %94 {strides = array<i32>} : memref<8x32xf32, #tpu.memory_space<vmem>>, vector<1x32xf32>,
    %c4_i32 = arith.constant 4 : i32
    %97 = arith.index_cast %c4_i32 : i32 to index
    %c0_26 = arith.constant 0 : index
    %98 = vector.load %arg7[%97, %c0_26] : memref<8x128xf32, #tpu.memory_space<vmem>>, vector<1x128xf32>
    %cst_27 = arith.constant dense<0.000000e+00> : vector<1x128xf32>
    %99 = tpu.matmul %94, %7, %cst_27 {dimension_numbers = #tpu.dot_dimension_numbers<[1], [0], [0], [1], [0, 0, 1, 1], [], []>} : vector<1x32xf32>, vector<32x128xf32>, vector<1x128xf32> -> vector<1x128xf32>
    %100 = arith.addf %98, %99 : vector<1x128xf32>
    %101 = vector.extract_strided_slice %100 {offsets = [0, 0], sizes = [1, 96], strides = [1, 1]} : vector<1x128xf32> to vector<1x96xf32>
    %102 = arith.negf %101 : vector<1x96xf32>
    %103 = math.exp %102 : vector<1x96xf32>
    %cst_28 = arith.constant 1.000000e+00 : f32
    %104 = vector.broadcast %cst_28 : f32 to vector<1x96xf32>
    %105 = arith.addf %104, %103 : vector<1x96xf32>
    %106 = arith.divf %104, %105 : vector<1x96xf32>
    %107 = vector.extract_strided_slice %100 {offsets = [0, 96], sizes = [1, 32], strides = [1, 1]} : vector<1x128xf32> to vector<1x32xf32>
    %108 = math.tanh %107 : vector<1x32xf32>
    %109 = vector.extract_strided_slice %106 {offsets = [0, 0], sizes = [1, 32], strides = [1, 1]} : vector<1x96xf32> to vector<1x32xf32>
    %110 = vector.extract_strided_slice %106 {offsets = [0, 32], sizes = [1, 32], strides = [1, 1]} : vector<1x96xf32> to vector<1x32xf32>
    %111 = vector.extract_strided_slice %106 {offsets = [0, 64], sizes = [1, 32], strides = [1, 1]} : vector<1x96xf32> to vector<1x32xf32>
    %112 = arith.mulf %110, %92 : vector<1x32xf32>
    %113 = arith.mulf %109, %108 : vector<1x32xf32>
    %114 = arith.addf %112, %113 : vector<1x32xf32>
    %115 = math.tanh %114 : vector<1x32xf32>
    %116 = arith.mulf %111, %115 : vector<1x32xf32>
    %117 = arith.index_cast %c4_i32 : i32 to index
    %c0_29 = arith.constant 0 : index
    %118 = vector.load %arg4[%117, %c0_29] : memref<8x32xf32, #tpu.memory_space<vmem>>, vector<1x32xf32>
    tpu.vector_store %arg4[%117, %c0_29], %116 {strides = array<i32>} : memref<8x32xf32, #tpu.memory_space<vmem>>, vector<1x32xf32>,
    %c5_i32 = arith.constant 5 : i32
    %119 = arith.index_cast %c5_i32 : i32 to index
    %c0_30 = arith.constant 0 : index
    %120 = vector.load %arg7[%119, %c0_30] : memref<8x128xf32, #tpu.memory_space<vmem>>, vector<1x128xf32>
    %cst_31 = arith.constant dense<0.000000e+00> : vector<1x128xf32>
    %121 = tpu.matmul %116, %7, %cst_31 {dimension_numbers = #tpu.dot_dimension_numbers<[1], [0], [0], [1], [0, 0, 1, 1], [], []>} : vector<1x32xf32>, vector<32x128xf32>, vector<1x128xf32> -> vector<1x128xf32>
    %122 = arith.addf %120, %121 : vector<1x128xf32>
    %123 = vector.extract_strided_slice %122 {offsets = [0, 0], sizes = [1, 96], strides = [1, 1]} : vector<1x128xf32> to vector<1x96xf32>
    %124 = arith.negf %123 : vector<1x96xf32>
    %125 = math.exp %124 : vector<1x96xf32>
    %cst_32 = arith.constant 1.000000e+00 : f32
    %126 = vector.broadcast %cst_32 : f32 to vector<1x96xf32>
    %127 = arith.addf %126, %125 : vector<1x96xf32>
    %128 = arith.divf %126, %127 : vector<1x96xf32>
    %129 = vector.extract_strided_slice %122 {offsets = [0, 96], sizes = [1, 32], strides = [1, 1]} : vector<1x128xf32> to vector<1x32xf32>
    %130 = math.tanh %129 : vector<1x32xf32>
    %131 = vector.extract_strided_slice %128 {offsets = [0, 0], sizes = [1, 32], strides = [1, 1]} : vector<1x96xf32> to vector<1x32xf32>
    %132 = vector.extract_strided_slice %128 {offsets = [0, 32], sizes = [1, 32], strides = [1, 1]} : vector<1x96xf32> to vector<1x32xf32>
    %133 = vector.extract_strided_slice %128 {offsets = [0, 64], sizes = [1, 32], strides = [1, 1]} : vector<1x96xf32> to vector<1x32xf32>
    %134 = arith.mulf %132, %114 : vector<1x32xf32>
    %135 = arith.mulf %131, %130 : vector<1x32xf32>
    %136 = arith.addf %134, %135 : vector<1x32xf32>
    %137 = math.tanh %136 : vector<1x32xf32>
    %138 = arith.mulf %133, %137 : vector<1x32xf32>
    %139 = arith.index_cast %c5_i32 : i32 to index
    %c0_33 = arith.constant 0 : index
    %140 = vector.load %arg4[%139, %c0_33] : memref<8x32xf32, #tpu.memory_space<vmem>>, vector<1x32xf32>
    tpu.vector_store %arg4[%139, %c0_33], %138 {strides = array<i32>} : memref<8x32xf32, #tpu.memory_space<vmem>>, vector<1x32xf32>,
    %c6_i32 = arith.constant 6 : i32
    %141 = arith.index_cast %c6_i32 : i32 to index
    %c0_34 = arith.constant 0 : index
    %142 = vector.load %arg7[%141, %c0_34] : memref<8x128xf32, #tpu.memory_space<vmem>>, vector<1x128xf32>
    %cst_35 = arith.constant dense<0.000000e+00> : vector<1x128xf32>
    %143 = tpu.matmul %138, %7, %cst_35 {dimension_numbers = #tpu.dot_dimension_numbers<[1], [0], [0], [1], [0, 0, 1, 1], [], []>} : vector<1x32xf32>, vector<32x128xf32>, vector<1x128xf32> -> vector<1x128xf32>
    %144 = arith.addf %142, %143 : vector<1x128xf32>
    %145 = vector.extract_strided_slice %144 {offsets = [0, 0], sizes = [1, 96], strides = [1, 1]} : vector<1x128xf32> to vector<1x96xf32>
    %146 = arith.negf %145 : vector<1x96xf32>
    %147 = math.exp %146 : vector<1x96xf32>
    %cst_36 = arith.constant 1.000000e+00 : f32
    %148 = vector.broadcast %cst_36 : f32 to vector<1x96xf32>
    %149 = arith.addf %148, %147 : vector<1x96xf32>
    %150 = arith.divf %148, %149 : vector<1x96xf32>
    %151 = vector.extract_strided_slice %144 {offsets = [0, 96], sizes = [1, 32], strides = [1, 1]} : vector<1x128xf32> to vector<1x32xf32>
    %152 = math.tanh %151 : vector<1x32xf32>
    %153 = vector.extract_strided_slice %150 {offsets = [0, 0], sizes = [1, 32], strides = [1, 1]} : vector<1x96xf32> to vector<1x32xf32>
    %154 = vector.extract_strided_slice %150 {offsets = [0, 32], sizes = [1, 32], strides = [1, 1]} : vector<1x96xf32> to vector<1x32xf32>
    %155 = vector.extract_strided_slice %150 {offsets = [0, 64], sizes = [1, 32], strides = [1, 1]} : vector<1x96xf32> to vector<1x32xf32>
    %156 = arith.mulf %154, %136 : vector<1x32xf32>
    %157 = arith.mulf %153, %152 : vector<1x32xf32>
    %158 = arith.addf %156, %157 : vector<1x32xf32>
    %159 = math.tanh %158 : vector<1x32xf32>
    %160 = arith.mulf %155, %159 : vector<1x32xf32>
    %161 = arith.index_cast %c6_i32 : i32 to index
    %c0_37 = arith.constant 0 : index
    %162 = vector.load %arg4[%161, %c0_37] : memref<8x32xf32, #tpu.memory_space<vmem>>, vector<1x32xf32>
    tpu.vector_store %arg4[%161, %c0_37], %160 {strides = array<i32>} : memref<8x32xf32, #tpu.memory_space<vmem>>, vector<1x32xf32>,
    %c7_i32 = arith.constant 7 : i32
    %163 = arith.index_cast %c7_i32 : i32 to index
    %c0_38 = arith.constant 0 : index
    %164 = vector.load %arg7[%163, %c0_38] : memref<8x128xf32, #tpu.memory_space<vmem>>, vector<1x128xf32>
    %cst_39 = arith.constant dense<0.000000e+00> : vector<1x128xf32>
    %165 = tpu.matmul %160, %7, %cst_39 {dimension_numbers = #tpu.dot_dimension_numbers<[1], [0], [0], [1], [0, 0, 1, 1], [], []>} : vector<1x32xf32>, vector<32x128xf32>, vector<1x128xf32> -> vector<1x128xf32>
    %166 = arith.addf %164, %165 : vector<1x128xf32>
    %167 = vector.extract_strided_slice %166 {offsets = [0, 0], sizes = [1, 96], strides = [1, 1]} : vector<1x128xf32> to vector<1x96xf32>
    %168 = arith.negf %167 : vector<1x96xf32>
    %169 = math.exp %168 : vector<1x96xf32>
    %cst_40 = arith.constant 1.000000e+00 : f32
    %170 = vector.broadcast %cst_40 : f32 to vector<1x96xf32>
    %171 = arith.addf %170, %169 : vector<1x96xf32>
    %172 = arith.divf %170, %171 : vector<1x96xf32>
    %173 = vector.extract_strided_slice %166 {offsets = [0, 96], sizes = [1, 32], strides = [1, 1]} : vector<1x128xf32> to vector<1x32xf32>
    %174 = math.tanh %173 : vector<1x32xf32>
    %175 = vector.extract_strided_slice %172 {offsets = [0, 0], sizes = [1, 32], strides = [1, 1]} : vector<1x96xf32> to vector<1x32xf32>
    %176 = vector.extract_strided_slice %172 {offsets = [0, 32], sizes = [1, 32], strides = [1, 1]} : vector<1x96xf32> to vector<1x32xf32>
    %177 = vector.extract_strided_slice %172 {offsets = [0, 64], sizes = [1, 32], strides = [1, 1]} : vector<1x96xf32> to vector<1x32xf32>
    %178 = arith.mulf %176, %158 : vector<1x32xf32>
    %179 = arith.mulf %175, %174 : vector<1x32xf32>
    %180 = arith.addf %178, %179 : vector<1x32xf32>
    %181 = math.tanh %180 : vector<1x32xf32>
    %182 = arith.mulf %177, %181 : vector<1x32xf32>
    %183 = arith.index_cast %c7_i32 : i32 to index
    %c0_41 = arith.constant 0 : index
    %184 = vector.load %arg4[%183, %c0_41] : memref<8x32xf32, #tpu.memory_space<vmem>>, vector<1x32xf32>
    tpu.vector_store %arg4[%183, %c0_41], %182 {strides = array<i32>} : memref<8x32xf32, #tpu.memory_space<vmem>>, vector<1x32xf32>,
    %c8_i32 = arith.constant 8 : i32
    %c0_42 = arith.constant 0 : index
    %c0_43 = arith.constant 0 : index
    %185 = vector.load %arg5[%c0_42, %c0_43] : memref<1x32xf32, #tpu.memory_space<vmem>>, vector<1x32xf32>
    tpu.vector_store %arg5[%c0_42, %c0_43], %182 {strides = array<i32>} : memref<1x32xf32, #tpu.memory_space<vmem>>, vector<1x32xf32>,
    %c0_44 = arith.constant 0 : index
    %c0_45 = arith.constant 0 : index
    %186 = vector.load %arg6[%c0_44, %c0_45] : memref<1x32xf32, #tpu.memory_space<vmem>>, vector<1x32xf32>
    tpu.vector_store %arg6[%c0_44, %c0_45], %180 {strides = array<i32>} : memref<1x32xf32, #tpu.memory_space<vmem>>, vector<1x32xf32>,
    return
  }
}

</mosaic_0001>

<llo_original>
// kernel: bilstm_pallas.1
$region0: #{bilstm_pallas.1}
  #allocation0 [shape = 'u32[]', space=smem, size = 0x4, offset = 0x4, fixed_abs, tag = 'smem constant byte address 0x4 - core index']
  #allocation1 [shape = 'u32[72,128]{1,0:T(1,128)}', space=vmem, size = 0x9000, scoped, tag = 'internal scratch']
  #allocation2 [shape = 'f32[8,128]{1,0:T(8,128)}', space=vmem, size = 0x1000, scoped, tag = 'scratch operand']
  %s0 = inlined_call_operand.vmem [shape: f32[8,64], index: 0, kind: input, shape index: {}]
  %s1 = inlined_call_operand.hbm [shape: f32[64,128], index: 1, kind: input, shape index: {}]
  %s2 = inlined_call_operand.vmem [shape: f32[32,128], index: 2, kind: input, shape index: {}]
  %s3 = inlined_call_operand.vmem [shape: f32[1,128], index: 3, kind: input, shape index: {}]
  %s4 = inlined_call_operand.vmem [shape: f32[8,32], index: 4, kind: output, shape index: {0}]
  %s5 = inlined_call_operand.vmem [shape: f32[1,32], index: 5, kind: output, shape index: {1}]
  %s6 = inlined_call_operand.vmem [shape: f32[1,32], index: 6, kind: output, shape index: {2}]
  %7 = xla_tuple %s4, %s5, %s6
  %s8 = sld [smem:[#allocation0]]
  $region46: #{bilstm_pallas.1} parent=0
    _
  %s10 = ssub.s32 1, %s8
  %s11 = scalar_select 0, %s10, %s8
  $region1: #{bilstm_pallas.1} parent=0
    #allocation3 [shape = 'u8[32768]{0}', space=vmem, size = 0x8000, scoped, tag = 'input window, operand 1, single buffered']
    #allocation4 [shape = 's32[1]{0}', space=sflag, size = 0x4, scoped, tag = 'scoped memory for bilstm_pallas.1']
    %12 = vsyncpa [#allocation4], 0
    // Predicated region
    $region2: #{bilstm_pallas.1} parent=1 // pred_check
      _
    $region3: #{bilstm_pallas.1} parent=1 // pred_check_branch
      %14 = sbr.rel (0) target = $region5
    $region4: #{bilstm_pallas.1} parent=1 // pred_region
      _
    $region5: #{bilstm_pallas.1} parent=1 // pred_fallthru
      _
    // Predicated region
    $region6: #{bilstm_pallas.1} parent=1 // pred_check
      _
    $region7: #{bilstm_pallas.1} parent=1 // pred_check_branch
      %16 = sbr.rel (0) target = $region9
    $region8: #{bilstm_pallas.1} parent=1 // pred_region
      %18 = vsyncadd [#allocation4], 0
      %s19 = sshll.u32 %s1, 4
      %s20 = int_to_ptr.hbm [resolvable:$true] %s19
      %s21 = sshll.u32 [#allocation3], 4
      %s22 = int_to_ptr.vmem [resolvable:$true] %s21
      %27 = dma.hbm_to_vmem [thread:$0]  %s20, 1024, %s22, [#allocation4], 128, 128, 8
    $region9: #{bilstm_pallas.1} parent=1 // pred_fallthru
      _
    // Predicated region
    $region10: #{bilstm_pallas.1} parent=1 // pred_check
      _
    $region11: #{bilstm_pallas.1} parent=1 // pred_check_branch
      %29 = sbr.rel (0) target = $region13
    $region12: #{bilstm_pallas.1} parent=1 // pred_region
      _
    $region13: #{bilstm_pallas.1} parent=1 // pred_fallthru
      _
    // Predicated region
    $region14: #{bilstm_pallas.1} parent=1 // pred_check
      _
    $region15: #{bilstm_pallas.1} parent=1 // pred_check_branch
      %31 = sbr.rel (0) target = $region17
    $region16: #{bilstm_pallas.1} parent=1 // pred_region
      _
    $region17: #{bilstm_pallas.1} parent=1 // pred_fallthru
      _
    // Predicated region
    $region18: #{bilstm_pallas.1} parent=1 // pred_check
      _
    $region19: #{bilstm_pallas.1} parent=1 // pred_check_branch
      %33 = sbr.rel (0) target = $region21
    $region20: #{bilstm_pallas.1} parent=1 // pred_region
      %35 = dma.done [#allocation4], 1024
    $region21: #{bilstm_pallas.1} parent=1 // pred_fallthru
      _
    %v36 = vld [vmem:[%s0] sm:$0xff]
    %v37 = vld [vmem:[#allocation3] sm:$0xff]
    %v38 = vld [vmem:[#allocation3 + $0x8] sm:$0xff]
    %v39 = vld [vmem:[#allocation3 + $0x10] sm:$0xff]
    %v40 = vld [vmem:[#allocation3 + $0x18] sm:$0xff]
    %v41 = vld [vmem:[#allocation3 + $0x20] sm:$0xff]
    %v42 = vld [vmem:[#allocation3 + $0x28] sm:$0xff]
    %v43 = vld [vmem:[#allocation3 + $0x30] sm:$0xff]
    %v44 = vld [vmem:[#allocation3 + $0x38] sm:$0xff]
    %v45 = vld [vmem:[%s3] sm:$0x1]
    %v47 = vperm.slane %v45, 0
    %vm49 = vcmask 523264
    %v51 = vsel %vm49, %v36, 0
    %53 = vmatpush.msra.mxu0 0.0
    %54 = vmatpush.msra.mxu0 0.0
    %55 = vmatpush.msra.mxu0 0.0
    %56 = vmatpush.msra.mxu0 0.0
    %57 = vmatpush.msra.mxu0 0.0
    %58 = vmatpush.msra.mxu0 0.0
    %59 = vmatpush.msra.mxu0 0.0
    %60 = vmatpush.msra.mxu0 0.0
    %61 = vmatpush.msra.mxu0 %v44
    %62 = vmatpush.msra.mxu0 %v43
    %63 = vmatpush.msra.mxu0 %v42
    %64 = vmatpush.msra.mxu0 %v41
    %65 = vmatpush.msra.mxu0 %v40
    %66 = vmatpush.msra.mxu0 %v39
    %67 = vmatpush.msra.mxu0 %v38
    %68 = vmatpush.msra.mxu0 %v37
    %69 = vmatmul.f32.gmra.mxu0 %v51
    %v70 = vpop.f32.mrf.mxu0
    %v71 = vadd.f32 %v47, %v70
    %72 = vdwg.mxu0
    %73 = vst [vmem:[#allocation2] sm:$0xff] %v71
    %v74 = vld [vmem:[%s2] sm:$0xff]
    %v75 = vld [vmem:[%s2 + $0x8] sm:$0xff]
    %v76 = vld [vmem:[%s2 + $0x10] sm:$0xff]
    %v77 = vld [vmem:[%s2 + $0x18] sm:$0xff]
    %v78 = vld [vmem:[#allocation2] sm:$0x1]
    %vm79 = vcmask 261120
    %v81 = vsel %vm79, 0.0, 0
    %83 = vmatpush.msra.mxu0 0.0
    %84 = vmatpush.msra.mxu0 0.0
    %85 = vmatpush.msra.mxu0 0.0
    %86 = vmatpush.msra.mxu0 0.0
    %87 = vmatpush.msra.mxu0 0.0
    %88 = vmatpush.msra.mxu0 0.0
    %89 = vmatpush.msra.mxu0 0.0
    %90 = vmatpush.msra.mxu0 0.0
    %91 = vmatpush.msra.mxu0 0.0
    %92 = vmatpush.msra.mxu0 0.0
    %93 = vmatpush.msra.mxu0 0.0
    %94 = vmatpush.msra.mxu0 0.0
    %95 = vmatpush.msra.mxu0 %v77
    %96 = vmatpush.msra.mxu0 %v76
    %97 = vmatpush.msra.mxu0 %v75
    %98 = vmatpush.msra.mxu0 %v74
    %99 = vmatmul.f32.gmra.mxu0 %v81
    %v100 = vpop.f32.mrf.mxu0
    %v101 = vadd.f32 0.0, %v100
    %102 = vdwg.mxu0
    %v103 = vadd.f32 %v78, %v101
    %v104 = vxor.u32 %v103, 2147483648
    %v105 = vmul.f32 %v104, 1.442695
    %v106 = vpow.pop %v105
    %v107 = vadd.f32 %v106, 1.0
    %v108 = vrcp.pop %v107
    %v109 = vmul.f32 %v107, %v108
    %v110 = vsub.f32 1.0, %v109
    %v111 = vmul.f32 %v108, %v110
    %v112 = vadd.f32 %v108, %v111
    %vm113 = vweird.f32 %v107
    %vm114 = vweird.f32 %v108
    %vm115 = vmor %vm113, %vm114
    %v116 = vsel %vm115, %v108, %v112
    %v117 = vand.u32 2147483647, %v107
    %vm118 = vcmp.eq.f32.partialorder %v117, 8.507059e+37
    %v119 = vand.u32 %v107, 2147483648
    %v120 = vor.u32 1.1754944e-38, %v119
    %v121 = vsel %vm118, %v120, %v116
    %v122 = vmul.f32 1.0, %v121
    %v123 = vtanh.pop %v103
    %v124 = vmul.f32 %v122, 0.0
    %126 = vrot.lane.b32.xlu0 %v123, 32
    %v127 = vpop.permute.xlu0 %126
    %v129 = vmul.f32 %v122, %v127
    %131 = vrot.lane.b32.xlu0 %v129, 32
    %v132 = vpop.permute.xlu0 %131
    %v134 = vadd.f32 %v124, %v132
    %v135 = vtanh.pop %v134
    %137 = vrot.lane.b32.xlu0 %v135, 32
    %v138 = vpop.permute.xlu0 %137
    %v140 = vmul.f32 %v122, %v138
    %142 = vrot.lane.b32.xlu0 %v140, 64
    %v143 = vpop.permute.xlu0 %142
    %vm145 = vcmask 253952
    %146 = vst.msk [vmem:[%s4] sm:$0x1] %vm145, %v143
    %v147 = vld [vmem:[#allocation2 + $0x1] sm:$0x1]
    %v148 = vsel %vm79, %v143, 0
    %150 = vmatpush.msra.mxu0 0.0
    %151 = vmatpush.msra.mxu0 0.0
    %152 = vmatpush.msra.mxu0 0.0
    %153 = vmatpush.msra.mxu0 0.0
    %154 = vmatpush.msra.mxu0 0.0
    %155 = vmatpush.msra.mxu0 0.0
    %156 = vmatpush.msra.mxu0 0.0
    %157 = vmatpush.msra.mxu0 0.0
    %158 = vmatpush.msra.mxu0 0.0
    %159 = vmatpush.msra.mxu0 0.0
    %160 = vmatpush.msra.mxu0 0.0
    %161 = vmatpush.msra.mxu0 0.0
    %162 = vmatpush.msra.mxu0 %v77
    %163 = vmatpush.msra.mxu0 %v76
    %164 = vmatpush.msra.mxu0 %v75
    %165 = vmatpush.msra.mxu0 %v74
    %166 = vmatmul.f32.gmra.mxu0 %v148
    %v167 = vpop.f32.mrf.mxu0
    %v168 = vadd.f32 0.0, %v167
    %169 = vdwg.mxu0
    %v170 = vadd.f32 %v147, %v168
    %v171 = vxor.u32 %v170, 2147483648
    %v172 = vmul.f32 %v171, 1.442695
    %v173 = vpow.pop %v172
    %v174 = vadd.f32 %v173, 1.0
    %v175 = vrcp.pop %v174
    %v176 = vmul.f32 %v174, %v175
    %v177 = vsub.f32 1.0, %v176
    %v178 = vmul.f32 %v175, %v177
    %v179 = vadd.f32 %v175, %v178
    %vm180 = vweird.f32 %v174
    %vm181 = vweird.f32 %v175
    %vm182 = vmor %vm180, %vm181
    %v183 = vsel %vm182, %v175, %v179
    %v184 = vand.u32 2147483647, %v174
    %vm185 = vcmp.eq.f32.partialorder %v184, 8.507059e+37
    %v186 = vand.u32 %v174, 2147483648
    %v187 = vor.u32 1.1754944e-38, %v186
    %v188 = vsel %vm185, %v187, %v183
    %v189 = vmul.f32 1.0, %v188
    %v190 = vtanh.pop %v170
    %v191 = vmul.f32 %v189, %v134
    %193 = vrot.lane.b32.xlu0 %v190, 32
    %v194 = vpop.permute.xlu0 %193
    %v196 = vmul.f32 %v189, %v194
    %198 = vrot.lane.b32.xlu0 %v196, 32
    %v199 = vpop.permute.xlu0 %198
    %v201 = vadd.f32 %v191, %v199
    %v202 = vtanh.pop %v201
    %204 = vrot.lane.b32.xlu0 %v202, 32
    %v205 = vpop.permute.xlu0 %204
    %v207 = vmul.f32 %v189, %v205
    %209 = vrot.lane.b32.xlu0 %v207, 64
    %v210 = vpop.permute.xlu0 %209
    %212 = vst.msk [vmem:[%s4 + $0x1] sm:$0x1] %vm145, %v210
    %v213 = vld [vmem:[#allocation2 + $0x2] sm:$0x1]
    %v214 = vsel %vm79, %v210, 0
    %216 = vmatpush.msra.mxu0 0.0
    %217 = vmatpush.msra.mxu0 0.0
    %218 = vmatpush.msra.mxu0 0.0
    %219 = vmatpush.msra.mxu0 0.0
    %220 = vmatpush.msra.mxu0 0.0
    %221 = vmatpush.msra.mxu0 0.0
    %222 = vmatpush.msra.mxu0 0.0
    %223 = vmatpush.msra.mxu0 0.0
    %224 = vmatpush.msra.mxu0 0.0
    %225 = vmatpush.msra.mxu0 0.0
    %226 = vmatpush.msra.mxu0 0.0
    %227 = vmatpush.msra.mxu0 0.0
    %228 = vmatpush.msra.mxu0 %v77
    %229 = vmatpush.msra.mxu0 %v76
    %230 = vmatpush.msra.mxu0 %v75
    %231 = vmatpush.msra.mxu0 %v74
    %232 = vmatmul.f32.gmra.mxu0 %v214
    %v233 = vpop.f32.mrf.mxu0
    %v234 = vadd.f32 0.0, %v233
    %235 = vdwg.mxu0
    %v236 = vadd.f32 %v213, %v234
    %v237 = vxor.u32 %v236, 2147483648
    %v238 = vmul.f32 %v237, 1.442695
    %v239 = vpow.pop %v238
    %v240 = vadd.f32 %v239, 1.0
    %v241 = vrcp.pop %v240
    %v242 = vmul.f32 %v240, %v241
    %v243 = vsub.f32 1.0, %v242
    %v244 = vmul.f32 %v241, %v243
    %v245 = vadd.f32 %v241, %v244
    %vm246 = vweird.f32 %v240
    %vm247 = vweird.f32 %v241
    %vm248 = vmor %vm246, %vm247
    %v249 = vsel %vm248, %v241, %v245
    %v250 = vand.u32 2147483647, %v240
    %vm251 = vcmp.eq.f32.partialorder %v250, 8.507059e+37
    %v252 = vand.u32 %v240, 2147483648
    %v253 = vor.u32 1.1754944e-38, %v252
    %v254 = vsel %vm251, %v253, %v249
    %v255 = vmul.f32 1.0, %v254
    %v256 = vtanh.pop %v236
    %v257 = vmul.f32 %v255, %v201
    %259 = vrot.lane.b32.xlu0 %v256, 32
    %v260 = vpop.permute.xlu0 %259
    %v262 = vmul.f32 %v255, %v260
    %264 = vrot.lane.b32.xlu0 %v262, 32
    %v265 = vpop.permute.xlu0 %264
    %v267 = vadd.f32 %v257, %v265
    %v268 = vtanh.pop %v267
    %270 = vrot.lane.b32.xlu0 %v268, 32
    %v271 = vpop.permute.xlu0 %270
    %v273 = vmul.f32 %v255, %v271
    %275 = vrot.lane.b32.xlu0 %v273, 64
    %v276 = vpop.permute.xlu0 %275
    %278 = vst.msk [vmem:[%s4 + $0x2] sm:$0x1] %vm145, %v276
    %v279 = vld [vmem:[#allocation2 + $0x3] sm:$0x1]
    %v280 = vsel %vm79, %v276, 0
    %282 = vmatpush.msra.mxu0 0.0
    %283 = vmatpush.msra.mxu0 0.0
    %284 = vmatpush.msra.mxu0 0.0
    %285 = vmatpush.msra.mxu0 0.0
    %286 = vmatpush.msra.mxu0 0.0
    %287 = vmatpush.msra.mxu0 0.0
    %288 = vmatpush.msra.mxu0 0.0
    %289 = vmatpush.msra.mxu0 0.0
    %290 = vmatpush.msra.mxu0 0.0
    %291 = vmatpush.msra.mxu0 0.0
    %292 = vmatpush.msra.mxu0 0.0
    %293 = vmatpush.msra.mxu0 0.0
    %294 = vmatpush.msra.mxu0 %v77
    %295 = vmatpush.msra.mxu0 %v76
    %296 = vmatpush.msra.mxu0 %v75
    %297 = vmatpush.msra.mxu0 %v74
    %298 = vmatmul.f32.gmra.mxu0 %v280
    %v299 = vpop.f32.mrf.mxu0
    %v300 = vadd.f32 0.0, %v299
    %301 = vdwg.mxu0
    %v302 = vadd.f32 %v279, %v300
    %v303 = vxor.u32 %v302, 2147483648
    %v304 = vmul.f32 %v303, 1.442695
    %v305 = vpow.pop %v304
    %v306 = vadd.f32 %v305, 1.0
    %v307 = vrcp.pop %v306
    %v308 = vmul.f32 %v306, %v307
    %v309 = vsub.f32 1.0, %v308
    %v310 = vmul.f32 %v307, %v309
    %v311 = vadd.f32 %v307, %v310
    %vm312 = vweird.f32 %v306
    %vm313 = vweird.f32 %v307
    %vm314 = vmor %vm312, %vm313
    %v315 = vsel %vm314, %v307, %v311
    %v316 = vand.u32 2147483647, %v306
    %vm317 = vcmp.eq.f32.partialorder %v316, 8.507059e+37
    %v318 = vand.u32 %v306, 2147483648
    %v319 = vor.u32 1.1754944e-38, %v318
    %v320 = vsel %vm317, %v319, %v315
    %v321 = vmul.f32 1.0, %v320
    %v322 = vtanh.pop %v302
    %v323 = vmul.f32 %v321, %v267
    %325 = vrot.lane.b32.xlu0 %v322, 32
    %v326 = vpop.permute.xlu0 %325
    %v328 = vmul.f32 %v321, %v326
    %330 = vrot.lane.b32.xlu0 %v328, 32
    %v331 = vpop.permute.xlu0 %330
    %v333 = vadd.f32 %v323, %v331
    %v334 = vtanh.pop %v333
    %336 = vrot.lane.b32.xlu0 %v334, 32
    %v337 = vpop.permute.xlu0 %336
    %v339 = vmul.f32 %v321, %v337
    %341 = vrot.lane.b32.xlu0 %v339, 64
    %v342 = vpop.permute.xlu0 %341
    %344 = vst.msk [vmem:[%s4 + $0x3] sm:$0x1] %vm145, %v342
    %v345 = vld [vmem:[#allocation2 + $0x4] sm:$0x1]
    %v346 = vsel %vm79, %v342, 0
    %348 = vmatpush.msra.mxu0 0.0
    %349 = vmatpush.msra.mxu0 0.0
    %350 = vmatpush.msra.mxu0 0.0
    %351 = vmatpush.msra.mxu0 0.0
    %352 = vmatpush.msra.mxu0 0.0
    %353 = vmatpush.msra.mxu0 0.0
    %354 = vmatpush.msra.mxu0 0.0
    %355 = vmatpush.msra.mxu0 0.0
    %356 = vmatpush.msra.mxu0 0.0
    %357 = vmatpush.msra.mxu0 0.0
    %358 = vmatpush.msra.mxu0 0.0
    %359 = vmatpush.msra.mxu0 0.0
    %360 = vmatpush.msra.mxu0 %v77
    %361 = vmatpush.msra.mxu0 %v76
    %362 = vmatpush.msra.mxu0 %v75
    %363 = vmatpush.msra.mxu0 %v74
    %364 = vmatmul.f32.gmra.mxu0 %v346
    %v365 = vpop.f32.mrf.mxu0
    %v366 = vadd.f32 0.0, %v365
    %367 = vdwg.mxu0
    %v368 = vadd.f32 %v345, %v366
    %v369 = vxor.u32 %v368, 2147483648
    %v370 = vmul.f32 %v369, 1.442695
    %v371 = vpow.pop %v370
    %v372 = vadd.f32 %v371, 1.0
    %v373 = vrcp.pop %v372
    %v374 = vmul.f32 %v372, %v373
    %v375 = vsub.f32 1.0, %v374
    %v376 = vmul.f32 %v373, %v375
    %v377 = vadd.f32 %v373, %v376
    %vm378 = vweird.f32 %v372
    %vm379 = vweird.f32 %v373
    %vm380 = vmor %vm378, %vm379
    %v381 = vsel %vm380, %v373, %v377
    %v382 = vand.u32 2147483647, %v372
    %vm383 = vcmp.eq.f32.partialorder %v382, 8.507059e+37
    %v384 = vand.u32 %v372, 2147483648
    %v385 = vor.u32 1.1754944e-38, %v384
    %v386 = vsel %vm383, %v385, %v381
    %v387 = vmul.f32 1.0, %v386
    %v388 = vtanh.pop %v368
    %v389 = vmul.f32 %v387, %v333
    %391 = vrot.lane.b32.xlu0 %v388, 32
    %v392 = vpop.permute.xlu0 %391
    %v394 = vmul.f32 %v387, %v392
    %396 = vrot.lane.b32.xlu0 %v394, 32
    %v397 = vpop.permute.xlu0 %396
    %v399 = vadd.f32 %v389, %v397
    %v400 = vtanh.pop %v399
    %402 = vrot.lane.b32.xlu0 %v400, 32
    %v403 = vpop.permute.xlu0 %402
    %v405 = vmul.f32 %v387, %v403
    %407 = vrot.lane.b32.xlu0 %v405, 64
    %v408 = vpop.permute.xlu0 %407
    %410 = vst.msk [vmem:[%s4 + $0x4] sm:$0x1] %vm145, %v408
    %v411 = vld [vmem:[#allocation2 + $0x5] sm:$0x1]
    %v412 = vsel %vm79, %v408, 0
    %414 = vmatpush.msra.mxu0 0.0
    %415 = vmatpush.msra.mxu0 0.0
    %416 = vmatpush.msra.mxu0 0.0
    %417 = vmatpush.msra.mxu0 0.0
    %418 = vmatpush.msra.mxu0 0.0
    %419 = vmatpush.msra.mxu0 0.0
    %420 = vmatpush.msra.mxu0 0.0
    %421 = vmatpush.msra.mxu0 0.0
    %422 = vmatpush.msra.mxu0 0.0
    %423 = vmatpush.msra.mxu0 0.0
    %424 = vmatpush.msra.mxu0 0.0
    %425 = vmatpush.msra.mxu0 0.0
    %426 = vmatpush.msra.mxu0 %v77
    %427 = vmatpush.msra.mxu0 %v76
    %428 = vmatpush.msra.mxu0 %v75
    %429 = vmatpush.msra.mxu0 %v74
    %430 = vmatmul.f32.gmra.mxu0 %v412
    %v431 = vpop.f32.mrf.mxu0
    %v432 = vadd.f32 0.0, %v431
    %433 = vdwg.mxu0
    %v434 = vadd.f32 %v411, %v432
    %v435 = vxor.u32 %v434, 2147483648
    %v436 = vmul.f32 %v435, 1.442695
    %v437 = vpow.pop %v436
    %v438 = vadd.f32 %v437, 1.0
    %v439 = vrcp.pop %v438
    %v440 = vmul.f32 %v438, %v439
    %v441 = vsub.f32 1.0, %v440
    %v442 = vmul.f32 %v439, %v441
    %v443 = vadd.f32 %v439, %v442
    %vm444 = vweird.f32 %v438
    %vm445 = vweird.f32 %v439
    %vm446 = vmor %vm444, %vm445
    %v447 = vsel %vm446, %v439, %v443
    %v448 = vand.u32 2147483647, %v438
    %vm449 = vcmp.eq.f32.partialorder %v448, 8.507059e+37
    %v450 = vand.u32 %v438, 2147483648
    %v451 = vor.u32 1.1754944e-38, %v450
    %v452 = vsel %vm449, %v451, %v447
    %v453 = vmul.f32 1.0, %v452
    %v454 = vtanh.pop %v434
    %v455 = vmul.f32 %v453, %v399
    %457 = vrot.lane.b32.xlu0 %v454, 32
    %v458 = vpop.permute.xlu0 %457
    %v460 = vmul.f32 %v453, %v458
    %462 = vrot.lane.b32.xlu0 %v460, 32
    %v463 = vpop.permute.xlu0 %462
    %v465 = vadd.f32 %v455, %v463
    %v466 = vtanh.pop %v465
    %468 = vrot.lane.b32.xlu0 %v466, 32
    %v469 = vpop.permute.xlu0 %468
    %v471 = vmul.f32 %v453, %v469
    %473 = vrot.lane.b32.xlu0 %v471, 64
    %v474 = vpop.permute.xlu0 %473
    %476 = vst.msk [vmem:[%s4 + $0x5] sm:$0x1] %vm145, %v474
    %v477 = vld [vmem:[#allocation2 + $0x6] sm:$0x1]
    %v478 = vsel %vm79, %v474, 0
    %480 = vmatpush.msra.mxu0 0.0
    %481 = vmatpush.msra.mxu0 0.0
    %482 = vmatpush.msra.mxu0 0.0
    %483 = vmatpush.msra.mxu0 0.0
    %484 = vmatpush.msra.mxu0 0.0
    %485 = vmatpush.msra.mxu0 0.0
    %486 = vmatpush.msra.mxu0 0.0
    %487 = vmatpush.msra.mxu0 0.0
    %488 = vmatpush.msra.mxu0 0.0
    %489 = vmatpush.msra.mxu0 0.0
    %490 = vmatpush.msra.mxu0 0.0
    %491 = vmatpush.msra.mxu0 0.0
    %492 = vmatpush.msra.mxu0 %v77
    %493 = vmatpush.msra.mxu0 %v76
    %494 = vmatpush.msra.mxu0 %v75
    %495 = vmatpush.msra.mxu0 %v74
    %496 = vmatmul.f32.gmra.mxu0 %v478
    %v497 = vpop.f32.mrf.mxu0
    %v498 = vadd.f32 0.0, %v497
    %499 = vdwg.mxu0
    %v500 = vadd.f32 %v477, %v498
    %v501 = vxor.u32 %v500, 2147483648
    %v502 = vmul.f32 %v501, 1.442695
    %v503 = vpow.pop %v502
    %v504 = vadd.f32 %v503, 1.0
    %v505 = vrcp.pop %v504
    %v506 = vmul.f32 %v504, %v505
    %v507 = vsub.f32 1.0, %v506
    %v508 = vmul.f32 %v505, %v507
    %v509 = vadd.f32 %v505, %v508
    %vm510 = vweird.f32 %v504
    %vm511 = vweird.f32 %v505
    %vm512 = vmor %vm510, %vm511
    %v513 = vsel %vm512, %v505, %v509
    %v514 = vand.u32 2147483647, %v504
    %vm515 = vcmp.eq.f32.partialorder %v514, 8.507059e+37
    %v516 = vand.u32 %v504, 2147483648
    %v517 = vor.u32 1.1754944e-38, %v516
    %v518 = vsel %vm515, %v517, %v513
    %v519 = vmul.f32 1.0, %v518
    %v520 = vtanh.pop %v500
    %v521 = vmul.f32 %v519, %v465
    %523 = vrot.lane.b32.xlu0 %v520, 32
    %v524 = vpop.permute.xlu0 %523
    %v526 = vmul.f32 %v519, %v524
    %528 = vrot.lane.b32.xlu0 %v526, 32
    %v529 = vpop.permute.xlu0 %528
    %v531 = vadd.f32 %v521, %v529
    %v532 = vtanh.pop %v531
    %534 = vrot.lane.b32.xlu0 %v532, 32
    %v535 = vpop.permute.xlu0 %534
    %v537 = vmul.f32 %v519, %v535
    %539 = vrot.lane.b32.xlu0 %v537, 64
    %v540 = vpop.permute.xlu0 %539
    %542 = vst.msk [vmem:[%s4 + $0x6] sm:$0x1] %vm145, %v540
    %v543 = vld [vmem:[#allocation2 + $0x7] sm:$0x1]
    %v544 = vsel %vm79, %v540, 0
    %546 = vmatpush.msra.mxu0 0.0
    %547 = vmatpush.msra.mxu0 0.0
    %548 = vmatpush.msra.mxu0 0.0
    %549 = vmatpush.msra.mxu0 0.0
    %550 = vmatpush.msra.mxu0 0.0
    %551 = vmatpush.msra.mxu0 0.0
    %552 = vmatpush.msra.mxu0 0.0
    %553 = vmatpush.msra.mxu0 0.0
    %554 = vmatpush.msra.mxu0 0.0
    %555 = vmatpush.msra.mxu0 0.0
    %556 = vmatpush.msra.mxu0 0.0
    %557 = vmatpush.msra.mxu0 0.0
    %558 = vmatpush.msra.mxu0 %v77
    %559 = vmatpush.msra.mxu0 %v76
    %560 = vmatpush.msra.mxu0 %v75
    %561 = vmatpush.msra.mxu0 %v74
    %562 = vmatmul.f32.gmra.mxu0 %v544
    %v563 = vpop.f32.mrf.mxu0
    %v564 = vadd.f32 0.0, %v563
    %565 = vdwg.mxu0
    %v566 = vadd.f32 %v543, %v564
    %v567 = vxor.u32 %v566, 2147483648
    %v568 = vmul.f32 %v567, 1.442695
    %v569 = vpow.pop %v568
    %v570 = vadd.f32 %v569, 1.0
    %v571 = vrcp.pop %v570
    %v572 = vmul.f32 %v570, %v571
    %v573 = vsub.f32 1.0, %v572
    %v574 = vmul.f32 %v571, %v573
    %v575 = vadd.f32 %v571, %v574
    %vm576 = vweird.f32 %v570
    %vm577 = vweird.f32 %v571
    %vm578 = vmor %vm576, %vm577
    %v579 = vsel %vm578, %v571, %v575
    %v580 = vand.u32 2147483647, %v570
    %vm581 = vcmp.eq.f32.partialorder %v580, 8.507059e+37
    %v582 = vand.u32 %v570, 2147483648
    %v583 = vor.u32 1.1754944e-38, %v582
    %v584 = vsel %vm581, %v583, %v579
    %v585 = vmul.f32 1.0, %v584
    %v586 = vtanh.pop %v566
    %v587 = vmul.f32 %v585, %v531
    %589 = vrot.lane.b32.xlu0 %v586, 32
    %v590 = vpop.permute.xlu0 %589
    %v592 = vmul.f32 %v585, %v590
    %594 = vrot.lane.b32.xlu0 %v592, 32
    %v595 = vpop.permute.xlu0 %594
    %v597 = vadd.f32 %v587, %v595
    %v598 = vtanh.pop %v597
    %600 = vrot.lane.b32.xlu0 %v598, 32
    %v601 = vpop.permute.xlu0 %600
    %v603 = vmul.f32 %v585, %v601
    %605 = vrot.lane.b32.xlu0 %v603, 64
    %v606 = vpop.permute.xlu0 %605
    %608 = vst.msk [vmem:[%s4 + $0x7] sm:$0x1] %vm145, %v606
    %609 = vst.msk [vmem:[%s5] sm:$0x1] %vm145, %v606
    %611 = vrot.lane.b32.xlu0 %v597, 96
    %v612 = vpop.permute.xlu0 %611
    %614 = vst.msk [vmem:[%s6] sm:$0x1] %vm145, %v612
    // Predicated region
    $region22: #{bilstm_pallas.1} parent=1 // pred_check
      _
    $region23: #{bilstm_pallas.1} parent=1 // pred_check_branch
      %616 = sbr.rel (0) target = $region25
    $region24: #{bilstm_pallas.1} parent=1 // pred_region
      _
    $region25: #{bilstm_pallas.1} parent=1 // pred_fallthru
      _
    // Predicated region
    $region26: #{bilstm_pallas.1} parent=1 // pred_check
      _
    $region27: #{bilstm_pallas.1} parent=1 // pred_check_branch
      %618 = sbr.rel (0) target = $region29
    $region28: #{bilstm_pallas.1} parent=1 // pred_region
      _
    $region29: #{bilstm_pallas.1} parent=1 // pred_fallthru
      _
    // Predicated region
    $region30: #{bilstm_pallas.1} parent=1 // pred_check
      _
    $region31: #{bilstm_pallas.1} parent=1 // pred_check_branch
      %620 = sbr.rel (0) target = $region33
    $region32: #{bilstm_pallas.1} parent=1 // pred_region
      _
    $region33: #{bilstm_pallas.1} parent=1 // pred_fallthru
      _
    // Predicated region
    $region34: #{bilstm_pallas.1} parent=1 // pred_check
      _
    $region35: #{bilstm_pallas.1} parent=1 // pred_check_branch
      %622 = sbr.rel (0) target = $region37
    $region36: #{bilstm_pallas.1} parent=1 // pred_region
      _
    $region37: #{bilstm_pallas.1} parent=1 // pred_fallthru
      _
    // Predicated region
    $region38: #{bilstm_pallas.1} parent=1 // pred_check
      _
    $region39: #{bilstm_pallas.1} parent=1 // pred_check_branch
      %624 = sbr.rel (0) target = $region41
    $region40: #{bilstm_pallas.1} parent=1 // pred_region
      _
    $region41: #{bilstm_pallas.1} parent=1 // pred_fallthru
      _
    // Predicated region
    $region42: #{bilstm_pallas.1} parent=1 // pred_check
      _
    $region43: #{bilstm_pallas.1} parent=1 // pred_check_branch
      %626 = sbr.rel (0) target = $region45
    $region44: #{bilstm_pallas.1} parent=1 // pred_region
      _
    $region45: #{bilstm_pallas.1} parent=1 // pred_fallthru
      _
    %627 = vsyncpa [#allocation4], 1

</llo_original>
